<compile_context>
chip_gen: v7x
topology: tpu7x:2x2x1
jax: 0.10.0
libtpu: 0.0.40
codegen_flags: <defaults>
</compile_context>

<pallas_src>
import jax
import jax.numpy as jnp
from jax.experimental import pallas as pl
from jax.experimental.pallas import tpu as pltpu


def _linear_kernel(x_ref, w_ref, o_ref):
    # x_ref: (TB, D) activation tile, w_ref: (1, D) weight row (same block every step),
    # o_ref: (TB, 1) output tile.
    # VPU multiply (broadcast over sublanes) + XLU lane-reduce; accumulate in f32.
    prod = x_ref[...].astype(jnp.float32) * w_ref[...].astype(jnp.float32)   # (TB, D)
    y = jnp.sum(prod, axis=-1, keepdims=True)                                # (TB, 1)
    o_ref[...] = y.astype(o_ref.dtype)


def linear_forward(x: jax.Array, w: jax.Array, *, block_b: int = 1024) -> jax.Array:
    """x: (B, d_feature), w: (1, d_feature) -> (B, 1). Matches nn.Linear(d, 1, bias=False)."""
    B, D = x.shape
    assert w.shape == (1, D)

    # Batch tile: multiple of 8 (f32 sublane), capped so 2x double-buffered tiles stay tiny
    # relative to VMEM on all generations (1024 * D * 4B * 2 buffers = 256 KiB at D=32).
    if B <= block_b:
        tb = B if B % 8 == 0 or B < 8 else (B // 8) * 8
        tb = B if tb == B else tb
    else:
        tb = block_b
    if tb != B:
        tb = max(8, (tb // 8) * 8)

    num_blocks = pl.cdiv(B, tb)
    Bp = num_blocks * tb
    x_in = x if Bp == B else jnp.pad(x, ((0, Bp - B), (0, 0)))  # zero rows -> zero outputs

    out = pl.pallas_call(
        _linear_kernel,
        out_shape=jax.ShapeDtypeStruct((Bp, 1), x.dtype),
        grid=(num_blocks,),
        in_specs=[
            pl.BlockSpec((tb, D), lambda i: (i, 0)),   # tiled activations (pipelined DMA)
            pl.BlockSpec((1, D), lambda i: (0, 0)),    # weight row, same block every step
        ],
        out_specs=pl.BlockSpec((tb, 1), lambda i: (i, 0)),
        compiler_params=pltpu.CompilerParams(
            dimension_semantics=("parallel",),          # megacore-shard the batch axis (v7x)
        ),
    )(x_in, w)

    return out[:B] if Bp != B else out


if __name__ == "__main__":
    # Deterministic params / inputs (synthetic; config = {'d_feature': 32, 'weight_initialization': w0})
    d_feature = 32
    batch = 8

    key = jax.random.PRNGKey(0)
    kx, kw = jax.random.split(key)
    x = jax.random.normal(kx, (batch, d_feature), dtype=jnp.float32)
    w0 = jax.random.normal(kw, (1, d_feature), dtype=jnp.float32)  # deterministic weight init

    y = linear_forward(x, w0)
    jax.block_until_ready(y)

    # Sanity check against plain JAX reference
    y_ref = x @ w0.T
    assert y.shape == (batch, 1)
    assert jnp.allclose(y, y_ref, atol=1e-5, rtol=1e-5)

    print("KERNEL_OK")
</pallas_src>

<mosaic_0001>
module attributes {stable_mosaic.version = 11 : i64} {
  func.func @_linear_kernel(%arg0: i32, %arg1: memref<8x32xf32, #tpu.memory_space<vmem>>, %arg2: memref<1x32xf32, #tpu.memory_space<vmem>>, %arg3: memref<8x1xf32, #tpu.memory_space<vmem>>) attributes {dimension_semantics = [#tpu.dimension_semantics<parallel>], iteration_bounds = array<i64: 1>, scalar_prefetch = 0 : i64, scratch_operands = 0 : i64, tpu.core_type = #tpu.core_type<tc>, window_params = [{transform_indices = @transform_0, window_bounds = array<i64: 8, 32>}, {pipeline_mode = #tpu.pipeline_mode<synchronous>, transform_indices = @transform_1, window_bounds = array<i64: 1, 32>}, {transform_indices = @transform_2, window_bounds = array<i64: 8, 1>}]} {
    %c0 = arith.constant 0 : index
    %c0_0 = arith.constant 0 : index
    %0 = vector.load %arg1[%c0, %c0_0] : memref<8x32xf32, #tpu.memory_space<vmem>>, vector<8x32xf32>
    %c0_1 = arith.constant 0 : index
    %c0_2 = arith.constant 0 : index
    %1 = vector.load %arg2[%c0_1, %c0_2] : memref<1x32xf32, #tpu.memory_space<vmem>>, vector<1x32xf32>
    %2 = vector.broadcast %1 : vector<1x32xf32> to vector<8x32xf32>
    %3 = arith.mulf %0, %2 : vector<8x32xf32>
    %cst = arith.constant dense<0.000000e+00> : vector<8xf32>
    %4 = vector.multi_reduction <add>, %3, %cst [1] : vector<8x32xf32> to vector<8xf32>
    %5 = vector.shape_cast %4 : vector<8xf32> to vector<8x1xf32>
    %c0_3 = arith.constant 0 : index
    %c0_4 = arith.constant 0 : index
    %6 = vector.load %arg3[%c0_3, %c0_4] : memref<8x1xf32, #tpu.memory_space<vmem>>, vector<8x1xf32>
    tpu.vector_store %arg3[%c0_3, %c0_4], %5 {strides = array<i32>} : memref<8x1xf32, #tpu.memory_space<vmem>>, vector<8x1xf32>,
    return
  }
  func.func @transform_0(%arg0: i32) -> (i32, i32) {
    %c0_i32 = arith.constant 0 : i32
    %c0_i32_0 = arith.constant 0 : i32
    return %arg0, %c0_i32 : i32, i32
  }
  func.func @transform_1(%arg0: i32) -> (i32, i32) {
    %c0_i32 = arith.constant 0 : i32
    %c0_i32_0 = arith.constant 0 : i32
    %c0_i32_1 = arith.constant 0 : i32
    return %c0_i32, %c0_i32_0 : i32, i32
  }
  func.func @transform_2(%arg0: i32) -> (i32, i32) {
    %c0_i32 = arith.constant 0 : i32
    %c0_i32_0 = arith.constant 0 : i32
    return %arg0, %c0_i32 : i32, i32
  }
}

</mosaic_0001>

<llo_original>
// kernel: tpu_custom_call.1
$region0: #{tpu_custom_call.1}
  #allocation0 [shape = 'u32[]', space=smem, size = 0x4, offset = 0x4, fixed_abs, tag = 'smem constant byte address 0x4 - core index']
  #allocation1 [shape = 'u32[144,128]{1,0:T(1,128)}', space=vmem, size = 0x12000, scoped, tag = 'internal scratch']
  %s0 = inlined_call_operand.hbm [shape: f32[8,32], index: 0, kind: input, shape index: {}]
  %s1 = inlined_call_operand.vmem [shape: f32[1,32], index: 1, kind: input, shape index: {}]
  %s2 = inlined_call_operand.vmem [shape: f32[8,1], index: 2, kind: output, shape index: {}]
  %s3 = sld [smem:[#allocation0]]
  $region22: #{tpu_custom_call.1} parent=0
    _
  %s5 = ssub.s32 1, %s3
  %s6 = scalar_select 0, %s5, %s3
  $region1: #{tpu_custom_call.1} parent=0
    #allocation2 [shape = 'u8[4096]{0}', space=vmem, size = 0x1000, scoped, tag = 'input window, operand 0, single buffered']
    #allocation3 [shape = 's32[1]{0}', space=sflag, size = 0x4, scoped, tag = 'scoped memory for tpu_custom_call.1']
    %7 = vsyncpa [#allocation3], 0
    // Predicated region
    $region2: #{tpu_custom_call.1} parent=1 // pred_check
      _
    $region3: #{tpu_custom_call.1} parent=1 // pred_check_branch
      %9 = sbr.rel (0) target = $region5
    $region4: #{tpu_custom_call.1} parent=1 // pred_region
      %s11 = ssub.s32 128, 128
      %12 = vsyncadd [#allocation3], %s11
      %s14 = sshll.u32 [#allocation2], 4
      %s15 = int_to_ptr.vmem [resolvable:$true] %s14
      %17 = dma.hbm_to_vmem [thread:$0]  %s0, 128, %s15, [#allocation3]
    $region5: #{tpu_custom_call.1} parent=1 // pred_fallthru
      _
    // Predicated region
    $region6: #{tpu_custom_call.1} parent=1 // pred_check
      _
    $region7: #{tpu_custom_call.1} parent=1 // pred_check_branch
      %19 = sbr.rel (0) target = $region9
    $region8: #{tpu_custom_call.1} parent=1 // pred_region
      _
    $region9: #{tpu_custom_call.1} parent=1 // pred_fallthru
      _
    // Predicated region
    $region10: #{tpu_custom_call.1} parent=1 // pred_check
      _
    $region11: #{tpu_custom_call.1} parent=1 // pred_check_branch
      %21 = sbr.rel (0) target = $region13
    $region12: #{tpu_custom_call.1} parent=1 // pred_region
      %22 = dma.done [#allocation3], 128
    $region13: #{tpu_custom_call.1} parent=1 // pred_fallthru
      _
    %v23 = vld [vmem:[#allocation2] sm:$0xff]
    %v24 = vld [vmem:[%s1] sm:$0x1]
    %v26 = vlaneseq
    %v27 = vshrl.u32 %v26, 7
    %v28 = vsub.s32 0, %v27
    %v29 = vrot.slane %v24, %v28
    %v31 = vmul.f32 %v23, %v29
    %vm32 = vcmask 261120
    %v33 = vsel %vm32, %v31, 0.0
    %34 = vadd.xlane.f32.xlu0 %v33
    %v35 = vpop.xlane.xlu0 %34
    %vm36 = vcmask 7168
    %37 = vst.msk [vmem:[%s2] sm:$0xff] %vm36, %v35
    // Predicated region
    $region14: #{tpu_custom_call.1} parent=1 // pred_check
      _
    $region15: #{tpu_custom_call.1} parent=1 // pred_check_branch
      %39 = sbr.rel (0) target = $region17
    $region16: #{tpu_custom_call.1} parent=1 // pred_region
      _
    $region17: #{tpu_custom_call.1} parent=1 // pred_fallthru
      _
    // Predicated region
    $region18: #{tpu_custom_call.1} parent=1 // pred_check
      _
    $region19: #{tpu_custom_call.1} parent=1 // pred_check_branch
      %41 = sbr.rel (0) target = $region21
    $region20: #{tpu_custom_call.1} parent=1 // pred_region
      _
    $region21: #{tpu_custom_call.1} parent=1 // pred_fallthru
      _
    %42 = vsyncpa [#allocation3], 1

</llo_original>
